<compile_context>
chip_gen: v7x
topology: tpu7x:2x2x1
jax: 0.10.0
libtpu: 0.0.40
codegen_flags: <defaults>
</compile_context>

<pallas_src>
import jax
import jax.numpy as jnp
from jax.experimental import pallas as pl
from jax.experimental.pallas import tpu as pltpu


def _should_fuse(cin, cout, lane=128):
    """Fuse down/up into one [Cout,Cin] matmul only when it is not more MXU work."""
    ti = -(-cin // lane)
    to = -(-cout // lane)
    return ti * to <= ti + to


def _vmem_budget_bytes():
    """Per-generation VMEM budget (leave ~25% headroom for compiler scratch)."""
    try:
        cap = int(getattr(pltpu.get_tpu_info(), "vmem_capacity_bytes", 64 << 20))
    except Exception:  # non-TPU trace context etc.
        cap = 64 << 20
    return (cap * 3) // 4


def quaplane_lora_conv2d(x, wd_all, wu_all, *, rank, network_alpha=None,
                         force_fuse=None, compute_dtype=None):
    """Forward pass of QuaplaneLoRAConv2dLayer ('quadra_v1', 1x1 convs).

    Args:
      x:      [B, Cin, H, W]  NCHW input, B divisible by 4.
      wd_all: [4, rank, Cin]  down 1x1-conv weights (overhead, side, front, back).
      wu_all: [4, Cout, rank] up   1x1-conv weights (overhead, side, front, back).
    Returns:
      [B, Cout, H, W] NCHW output in x.dtype.
    """
    B, Cin, H, W = x.shape
    assert B % 4 == 0, "batch must be divisible by 4 for quadra locon"
    Bq = B // 4
    Cout = wu_all.shape[1]
    HW = H * W

    orig_dtype = x.dtype
    if compute_dtype is None:
        # hidden_states.to(weight.dtype) in the module.  (On v5e, passing
        # compute_dtype=jnp.bfloat16 halves HBM traffic and uses the bf16 MXU.)
        compute_dtype = wd_all.dtype
    c_item = jnp.dtype(compute_dtype).itemsize
    o_item = jnp.dtype(orig_dtype).itemsize

    scale = 1.0 if network_alpha is None else float(network_alpha) / float(rank)
    fuse = _should_fuse(Cin, Cout) if force_fuse is None else bool(force_fuse)

    # ---- weights (tiny wrapper-side prep, done once) -------------------------
    if fuse:
        # W_eff = scale * (W_up @ W_down), shape [4, Cout, Cin]
        w_eff = jnp.einsum('por,prc->poc', wu_all, wd_all,
                           preferred_element_type=jnp.float32)
        weights = ((w_eff * scale).astype(compute_dtype),)
        weight_bytes = 2 * Cout * Cin * c_item           # double-buffered block
    else:
        wd = wd_all.astype(compute_dtype)                         # [4, rank, Cin]
        wu = (wu_all.astype(jnp.float32) * scale).astype(compute_dtype)  # [4, Cout, rank]
        weights = (wd, wu)
        weight_bytes = 2 * rank * (Cin + Cout) * c_item

    # ---- budget-driven tiling ------------------------------------------------
    budget = _vmem_budget_bytes()
    headroom = 2 << 20
    avail = max(budget - weight_bytes - headroom, 1 << 20)
    # double-buffered input + output tiles, per quadra-group, per hw element
    bytes_per_hw = 2 * (Cin * c_item + Cout * o_item)

    max_tile = max(128, ((avail // bytes_per_hw) // 128) * 128)
    if HW <= max_tile:
        tile_hw = HW
        # fold as many quadra groups per step as fit (<=8), must divide Bq
        bq_blk = 1
        for cand in range(min(Bq, 8), 0, -1):
            if Bq % cand == 0 and cand * bytes_per_hw * tile_hw <= avail:
                bq_blk = cand
                break
    else:
        # balanced edge tiles: even-sized 128-multiple tiles, no tiny trailer
        n_t0 = -(-HW // max_tile)
        tile_hw = min(max_tile, ((-(-HW // n_t0) + 127) // 128) * 128)
        bq_blk = 1
    # TODO(synk): for HW < 128 the output last dim is lane-sparse (masked
    # stores); folding Bq into the lane axis would need an HBM transpose pass.

    n_t = -(-HW // tile_hw)
    n_bq = Bq // bq_blk

    needed = weight_bytes + bq_blk * bytes_per_hw * tile_hw
    vmem_limit = int(min(budget, max(needed + (4 << 20), 32 << 20)))

    # ---- kernel bodies (closures over bq_blk) --------------------------------
    if fuse:
        def kernel(x_ref, w_ref, o_ref):
            # x_ref: [bq_blk, Cin, T], w_ref: [Cout, Cin], o_ref: [bq_blk, Cout, T]
            w = w_ref[...]
            for b in range(bq_blk):                     # static unroll (<= 8)
                o_ref[b] = jnp.dot(
                    w, x_ref[b], preferred_element_type=jnp.float32
                ).astype(o_ref.dtype)

        in_specs = [
            pl.BlockSpec((bq_blk, None, Cin, tile_hw), lambda p, q, t: (q, p, 0, t)),
            pl.BlockSpec((None, Cout, Cin), lambda p, q, t: (p, 0, 0)),
        ]
    else:
        def kernel(x_ref, wd_ref, wu_ref, o_ref):
            # x_ref: [bq_blk, Cin, T], wd_ref: [rank, Cin], wu_ref: [Cout, rank]
            wd_k = wd_ref[...]
            wu_k = wu_ref[...]
            for b in range(bq_blk):                     # static unroll (<= 8)
                down = jnp.dot(wd_k, x_ref[b],
                               preferred_element_type=jnp.float32)       # [rank, T]
                o_ref[b] = jnp.dot(
                    wu_k, down.astype(wu_k.dtype),
                    preferred_element_type=jnp.float32
                ).astype(o_ref.dtype)

        in_specs = [
            pl.BlockSpec((bq_blk, None, Cin, tile_hw), lambda p, q, t: (q, p, 0, t)),
            pl.BlockSpec((None, rank, Cin), lambda p, q, t: (p, 0, 0)),
            pl.BlockSpec((None, Cout, rank), lambda p, q, t: (p, 0, 0)),
        ]

    # ---- call ----------------------------------------------------------------
    # Pure reshape (no HBM transpose): x[4*q + p] is plane p of quadra-group q.
    x_planes = x.reshape(Bq, 4, Cin, HW)
    if x_planes.dtype != compute_dtype:
        x_planes = x_planes.astype(compute_dtype)

    y = pl.pallas_call(
        kernel,
        out_shape=jax.ShapeDtypeStruct((Bq, 4, Cout, HW), orig_dtype),
        grid_spec=pltpu.PrefetchScalarGridSpec(
            num_scalar_prefetch=0,
            grid=(4, n_bq, n_t),           # all independent -> megacore-friendly
            in_specs=in_specs,
            out_specs=pl.BlockSpec((bq_blk, None, Cout, tile_hw),
                                   lambda p, q, t: (q, p, 0, t)),
        ),
        compiler_params=pltpu.CompilerParams(
            dimension_semantics=("parallel", "parallel", "parallel"),
            vmem_limit_bytes=vmem_limit),
    )(x_planes, *weights)

    # [Bq, 4, Cout, HW] -> [B, Cout, H, W]  (pure reshape, free)
    return y.reshape(B, Cout, H, W)


def _reference(x, wd_all, wu_all, *, rank, network_alpha=None):
    """Pure-JAX reference mirroring the PyTorch forward (1x1 convs)."""
    B = x.shape[0]
    outs = []
    for p in range(4):
        xp = x[p::4]                                   # [Bq, Cin, H, W]
        down = jnp.einsum('bchw,rc->brhw', xp, wd_all[p])
        up = jnp.einsum('brhw,or->bohw', down, wu_all[p])
        outs.append(up)
    Bq, Cout, H, W = outs[0].shape
    out = jnp.stack(outs, axis=1).reshape(B, Cout, H, W)  # re-interleave p::4
    if network_alpha is not None:
        out = out * (network_alpha / rank)
    return out


if __name__ == "__main__":
    # Small, deterministic config.
    in_features, out_features, rank = 16, 32, 4
    B, H, W = 8, 16, 16          # B divisible by 4 -> Bq=2, HW = 256
    network_alpha = 8.0

    key = jax.random.PRNGKey(0)
    kx, kd, ku = jax.random.split(key, 3)

    x = jax.random.normal(kx, (B, in_features, H, W), dtype=jnp.float32)
    # down weights ~ N(0, 1/rank) like the module; up weights random (not zero)
    # so the test is non-trivial (module init would zero them -> zero output).
    wd_all = jax.random.normal(kd, (4, rank, in_features), jnp.float32) / rank
    wu_all = jax.random.normal(ku, (4, out_features, rank), jnp.float32) * 0.05

    ref = _reference(x, wd_all, wu_all, rank=rank, network_alpha=network_alpha)

    # Path 1: auto selection (fused single-matmul path at these narrow widths).
    out_fused = quaplane_lora_conv2d(x, wd_all, wu_all, rank=rank,
                                     network_alpha=network_alpha)
    out_fused = jax.block_until_ready(out_fused)
    assert out_fused.shape == (B, out_features, H, W)
    assert jnp.allclose(out_fused, ref, atol=1e-4, rtol=1e-4), \
        f"fused path max err {jnp.max(jnp.abs(out_fused - ref))}"

    # Path 2: force the two-matmul (wide-channel) path to validate it as well.
    out_2step = quaplane_lora_conv2d(x, wd_all, wu_all, rank=rank,
                                     network_alpha=network_alpha,
                                     force_fuse=False)
    out_2step = jax.block_until_ready(out_2step)
    assert jnp.allclose(out_2step, ref, atol=1e-4, rtol=1e-4), \
        f"two-step path max err {jnp.max(jnp.abs(out_2step - ref))}"

    print("KERNEL_OK")
</pallas_src>

<mosaic_0001>
module attributes {stable_mosaic.version = 11 : i64} {
  func.func @kernel(%arg0: i32, %arg1: i32, %arg2: i32, %arg3: memref<2x1x16x256xf32, #tpu.memory_space<vmem>>, %arg4: memref<1x32x16xf32, #tpu.memory_space<vmem>>, %arg5: memref<2x1x32x256xf32, #tpu.memory_space<vmem>>) attributes {dimension_semantics = [#tpu.dimension_semantics<parallel>, #tpu.dimension_semantics<parallel>, #tpu.dimension_semantics<parallel>], iteration_bounds = array<i64: 4, 1, 1>, scalar_prefetch = 0 : i64, scratch_operands = 0 : i64, tpu.core_type = #tpu.core_type<tc>, window_params = [{transform_indices = @transform_0, window_bounds = array<i64: 2, 1, 16, 256>}, {transform_indices = @transform_1, window_bounds = array<i64: 1, 32, 16>}, {transform_indices = @transform_2, window_bounds = array<i64: 2, 1, 32, 256>}]} {
    %c0 = arith.constant 0 : index
    %c0_0 = arith.constant 0 : index
    %c0_1 = arith.constant 0 : index
    %0 = vector.load %arg4[%c0, %c0_0, %c0_1] : memref<1x32x16xf32, #tpu.memory_space<vmem>>, vector<1x32x16xf32>
    %1 = vector.shape_cast %0 : vector<1x32x16xf32> to vector<32x16xf32>
    %c0_2 = arith.constant 0 : index
    %c0_3 = arith.constant 0 : index
    %c0_4 = arith.constant 0 : index
    %c0_5 = arith.constant 0 : index
    %2 = vector.load %arg3[%c0_2, %c0_3, %c0_4, %c0_5] : memref<2x1x16x256xf32, #tpu.memory_space<vmem>>, vector<1x1x16x256xf32>
    %3 = vector.shape_cast %2 : vector<1x1x16x256xf32> to vector<16x256xf32>
    %cst = arith.constant dense<0.000000e+00> : vector<32x256xf32>
    %4 = tpu.matmul %1, %3, %cst {dimension_numbers = #tpu.dot_dimension_numbers<[1], [0], [0], [1], [0, 0, 1, 1], [], []>} : vector<32x16xf32>, vector<16x256xf32>, vector<32x256xf32> -> vector<32x256xf32>
    %c0_6 = arith.constant 0 : index
    %c0_7 = arith.constant 0 : index
    %c0_8 = arith.constant 0 : index
    %c0_9 = arith.constant 0 : index
    %5 = vector.load %arg5[%c0_6, %c0_7, %c0_8, %c0_9] : memref<2x1x32x256xf32, #tpu.memory_space<vmem>>, vector<1x1x32x256xf32>
    %6 = vector.shape_cast %5 : vector<1x1x32x256xf32> to vector<32x256xf32>
    %7 = vector.shape_cast %4 : vector<32x256xf32> to vector<1x1x32x256xf32>
    tpu.vector_store %arg5[%c0_6, %c0_7, %c0_8, %c0_9], %7 {strides = array<i32>} : memref<2x1x32x256xf32, #tpu.memory_space<vmem>>, vector<1x1x32x256xf32>,
    %c1 = arith.constant 1 : index
    %c0_10 = arith.constant 0 : index
    %c0_11 = arith.constant 0 : index
    %c0_12 = arith.constant 0 : index
    %8 = vector.load %arg3[%c1, %c0_10, %c0_11, %c0_12] : memref<2x1x16x256xf32, #tpu.memory_space<vmem>>, vector<1x1x16x256xf32>
    %9 = vector.shape_cast %8 : vector<1x1x16x256xf32> to vector<16x256xf32>
    %cst_13 = arith.constant dense<0.000000e+00> : vector<32x256xf32>
    %10 = tpu.matmul %1, %9, %cst_13 {dimension_numbers = #tpu.dot_dimension_numbers<[1], [0], [0], [1], [0, 0, 1, 1], [], []>} : vector<32x16xf32>, vector<16x256xf32>, vector<32x256xf32> -> vector<32x256xf32>
    %c1_14 = arith.constant 1 : index
    %c0_15 = arith.constant 0 : index
    %c0_16 = arith.constant 0 : index
    %c0_17 = arith.constant 0 : index
    %11 = vector.load %arg5[%c1_14, %c0_15, %c0_16, %c0_17] : memref<2x1x32x256xf32, #tpu.memory_space<vmem>>, vector<1x1x32x256xf32>
    %12 = vector.shape_cast %11 : vector<1x1x32x256xf32> to vector<32x256xf32>
    %13 = vector.shape_cast %10 : vector<32x256xf32> to vector<1x1x32x256xf32>
    tpu.vector_store %arg5[%c1_14, %c0_15, %c0_16, %c0_17], %13 {strides = array<i32>} : memref<2x1x32x256xf32, #tpu.memory_space<vmem>>, vector<1x1x32x256xf32>,
    return
  }
  func.func @transform_0(%arg0: i32, %arg1: i32, %arg2: i32) -> (i32, i32, i32, i32) {
    %c0_i32 = arith.constant 0 : i32
    %c0_i32_0 = arith.constant 0 : i32
    return %arg1, %arg0, %c0_i32, %arg2 : i32, i32, i32, i32
  }
  func.func @transform_1(%arg0: i32, %arg1: i32, %arg2: i32) -> (i32, i32, i32) {
    %c0_i32 = arith.constant 0 : i32
    %c0_i32_0 = arith.constant 0 : i32
    %c0_i32_1 = arith.constant 0 : i32
    return %arg0, %c0_i32, %c0_i32_0 : i32, i32, i32
  }
  func.func @transform_2(%arg0: i32, %arg1: i32, %arg2: i32) -> (i32, i32, i32, i32) {
    %c0_i32 = arith.constant 0 : i32
    %c0_i32_0 = arith.constant 0 : i32
    return %arg1, %arg0, %c0_i32, %arg2 : i32, i32, i32, i32
  }
}

</mosaic_0001>

<llo_original>
// kernel: tpu_custom_call.1
$region0: #{tpu_custom_call.1}
  #allocation0 [shape = 'u32[]', space=smem, size = 0x4, offset = 0x4, fixed_abs, tag = 'smem constant byte address 0x4 - core index']
  #allocation1 [shape = 'u32[144,128]{1,0:T(1,128)}', space=vmem, size = 0x12000, scoped, tag = 'internal scratch']
  #allocation6 [shape = 's32[]', space=sflag, size = 0x4, offset = 0, fixed_abs, tag = 'sflag constant byte address 0x0 - dummy sync flag']
  #allocation8 [shape = 's32[]', space=sflag, size = 0x4, offset = 0, fixed_abs, tag = 'sflag constant byte address 0x0 - dummy sync flag']
  %s0 = inlined_call_operand.hbm [shape: f32[2,4,16,256], index: 0, kind: input, shape index: {}]
  %s1 = inlined_call_operand.vmem [shape: f32[4,32,16], index: 1, kind: input, shape index: {}]
  %s2 = inlined_call_operand.hbm [shape: f32[2,4,32,256], index: 2, kind: output, shape index: {}]
  %s3 = sld [smem:[#allocation0]]
  $region45: #{tpu_custom_call.1} parent=0
    _
  %s5 = ssub.s32 1, %s3
  %s6 = scalar_select 0, %s5, %s3
  $region1: #{tpu_custom_call.1} parent=0
    #allocation2 [shape = 'u8[65536]{0}', space=vmem, size = 0x10000, scoped, tag = 'input window, operand 0']
    #allocation3 [shape = 's32[2]{0}', space=sflag, size = 0x8, scoped, tag = 'scoped memory for tpu_custom_call.1']
    #allocation4 [shape = 's32[2]{0}', space=sflag, size = 0x8, scoped, tag = 'scoped memory for tpu_custom_call.1']
    #allocation5 [shape = 'u8[131072]{0}', space=vmem, size = 0x20000, scoped, tag = 'output window, operand 0']
    %7 = vsyncpa [#allocation3], 0
    %s8 = scalar_lea.sflag [#allocation3], 1
    %9 = vsyncpa %s8, 0
    %10 = vsyncpa [#allocation4], 0
    %s11 = scalar_lea.sflag [#allocation4], 1
    %12 = vsyncpa %s11, 0
    loop: start=0, step=1, limit=6
    $region2: #{tpu_custom_call.1} parent=1 // loop_pre_header
      _
    $region3: #{tpu_custom_call.1} parent=1 // loop_header
      %s14 = sphi 0, %s18
      %p15 = scmp.ge.s32.totalorder %s14, 6
      %s21 = sphi 0, %s40
      %s22 = sphi 0, %s36
      %s23 = sphi 0, %s32
      %s24 = sphi 0, %s21
      %s25 = sphi 0, %s22
      %s26 = sphi 0, %s23
      %s27 = sphi 0, %s24
      %s28 = sphi 0, %s25
      %s29 = sphi 0, %s26
      %s47 = sphi 0, %s49
      %s50 = sphi 0, %s47
      %s51 = sphi 0, %s50
      %s67 = sphi 0, %s51
      %s73 = sphi 0, %s75
      %s76 = sphi 0, %s73
      %s77 = sphi 0, %s76
      %s93 = sphi 0, %s77
      %s103 = sphi 0, %s105
      %s106 = sphi 0, %s103
      %s107 = sphi 0, %s106
      %s123 = sphi 0, %s107
    $region4: #{tpu_custom_call.1} parent=1 // loop_header_branch
      %17 = sbr.rel (%p15) target = $region8
    $region5: #{tpu_custom_call.1} parent=1 // loop_body
      %s19 = ssub.s32 %s14, 1
      %s20 = ssub.s32 %s14, 2
      %s30 = sadd.s32 1, %s23
      %p31 = scmp.ge.s32.totalorder %s30, 1
      %s32 = scalar_select %p31, 0, %s30
      %s33 = sadd.s32 1, %s22
      %s34 = scalar_select %p31, %s33, %s22
      %p35 = scmp.ge.s32.totalorder %s34, 1
      %s36 = scalar_select %p35, 0, %s34
      %s37 = sadd.s32 1, %s21
      %s38 = scalar_select %p35, %s37, %s21
      %p39 = scmp.ge.s32.totalorder %s38, 4
      %s40 = scalar_select %p39, 0, %s38
      %s41 = ssub.s32 %s22, %s36
      %s42 = ssub.s32 %s21, %s40
      %s43 = sor.u32 %s41, %s42
      %s44 = ssub.s32 %s23, %s32
      %s45 = sor.u32 %s43, %s44
      %p46 = scmp.eq.s32.totalorder %s45, 0
      %s48 = sadd.s32 %s47, 1
      %s49 = scalar_select %p46, %s47, %s48
      %p52 = pneg %p46
      %p53 = scmp.eq.s32.totalorder %s14, 3
      %p54 = por %p52, %p53
      %p55 = scmp.ne.s32.totalorder %s47, %s50
      %p56 = scmp.eq.s32.totalorder %s14, 0
      %p57 = por %p55, %p56
      %p58 = scmp.ne.s32.totalorder %s47, %s50
      %p59 = scmp.eq.s32.totalorder %s19, 3
      %p60 = por %p58, %p59
      %p61 = scmp.ne.s32.totalorder %s50, %s51
      %p62 = scmp.eq.s32.totalorder %s19, 0
      %p63 = por %p61, %p62
      %p64 = scmp.ne.s32.totalorder %s50, %s51
      %p65 = scmp.eq.s32.totalorder %s20, 3
      %p66 = por %p64, %p65
      %p68 = scmp.ne.s32.totalorder %s51, %s67
      %p69 = scmp.eq.s32.totalorder %s20, 0
      %p70 = por %p68, %p69
      %s71 = ssub.s32 %s21, %s40
      %p72 = scmp.eq.s32.totalorder %s71, 0
      %s74 = sadd.s32 %s73, 1
      %s75 = scalar_select %p72, %s73, %s74
      %p78 = pneg %p72
      %p79 = scmp.eq.s32.totalorder %s14, 3
      %p80 = por %p78, %p79
      %p81 = scmp.ne.s32.totalorder %s73, %s76
      %p82 = scmp.eq.s32.totalorder %s14, 0
      %p83 = por %p81, %p82
      %p84 = scmp.ne.s32.totalorder %s73, %s76
      %p85 = scmp.eq.s32.totalorder %s19, 3
      %p86 = por %p84, %p85
      %p87 = scmp.ne.s32.totalorder %s76, %s77
      %p88 = scmp.eq.s32.totalorder %s19, 0
      %p89 = por %p87, %p88
      %p90 = scmp.ne.s32.totalorder %s76, %s77
      %p91 = scmp.eq.s32.totalorder %s20, 3
      %p92 = por %p90, %p91
      %p94 = scmp.ne.s32.totalorder %s77, %s93
      %p95 = scmp.eq.s32.totalorder %s20, 0
      %p96 = por %p94, %p95
      %s97 = ssub.s32 %s22, %s36
      %s98 = ssub.s32 %s21, %s40
      %s99 = sor.u32 %s97, %s98
      %s100 = ssub.s32 %s23, %s32
      %s101 = sor.u32 %s99, %s100
      %p102 = scmp.eq.s32.totalorder %s101, 0
      %s104 = sadd.s32 %s103, 1
      %s105 = scalar_select %p102, %s103, %s104
      %p108 = pneg %p102
      %p109 = scmp.eq.s32.totalorder %s14, 3
      %p110 = por %p108, %p109
      %p111 = scmp.ne.s32.totalorder %s103, %s106
      %p112 = scmp.eq.s32.totalorder %s14, 0
      %p113 = por %p111, %p112
      %p114 = scmp.ne.s32.totalorder %s103, %s106
      %p115 = scmp.eq.s32.totalorder %s19, 3
      %p116 = por %p114, %p115
      %p117 = scmp.ne.s32.totalorder %s106, %s107
      %p118 = scmp.eq.s32.totalorder %s19, 0
      %p119 = por %p117, %p118
      %p120 = scmp.ne.s32.totalorder %s106, %s107
      %p121 = scmp.eq.s32.totalorder %s20, 3
      %p122 = por %p120, %p121
      %p124 = scmp.ne.s32.totalorder %s107, %s123
      %p125 = scmp.eq.s32.totalorder %s20, 0
      %p126 = por %p124, %p125
      %p127 = scmp.le.s32.totalorder 1, %s14
      %p128 = scmp.lt.s32.totalorder %s14, 5
      %p129 = pnand %p127, %p128
      %p130 = pneg %p129
      // Predicated region
      $region9: #{tpu_custom_call.1} parent=5 // pred_check
        _
      $region10: #{tpu_custom_call.1} parent=5 // pred_check_branch
        %132 = sbr.rel (%p129) target = $region12
      $region11: #{tpu_custom_call.1} parent=5 // pred_region
        %s133 = ssub.s32 %s14, 1
      $region12: #{tpu_custom_call.1} parent=5 // pred_fallthru
        _
      %p134 = scmp.lt.s32.totalorder %s14, 4
      // Predicated region
      $region13: #{tpu_custom_call.1} parent=5 // pred_check
        %p135 = pneg %p134
      $region14: #{tpu_custom_call.1} parent=5 // pred_check_branch
        %137 = sbr.rel (%p135) target = $region16
      $region15: #{tpu_custom_call.1} parent=5 // pred_region
        // Predicated region
        $region17: #{tpu_custom_call.1} parent=15 // pred_check
          %p138 = pneg %p57
        $region18: #{tpu_custom_call.1} parent=15 // pred_check_branch
          %140 = sbr.rel (%p138) target = $region20
        $region19: #{tpu_custom_call.1} parent=15 // pred_region
          #allocation7 [shape = 'u32[6]{0}', space=smem, size = 0x18, scoped, tag = 'DMA stride descriptor']
          %s141 = sand.u32 %s47, 1
          %s142 = scalar_lea.sflag [#allocation3], %s141
          %s143 = sand.u32 %s47, 1
          %s144 = smul.addr %s143, 64
          %s145 = scalar_lea.vmem [#allocation2], %s144
          %s146 = smul.u32 2, %s22
          %s147 = smul.u32 2, %s23
          %s149 = ssub.s32 1024, 1024
          %150 = vsyncadd %s142, %s149
          %s151 = smul.addr %s21, 4
          %s152 = sadd.s32 %s147, %s151
          %s153 = smul.addr %s146, 16
          %s154 = sadd.s32 %s152, %s153
          %s155 = smul.addr %s154, 128
          %s156 = scalar_lea.hbm %s0, %s155
          %s158 = sshll.u32 1, 14
          %s159 = sxor.u32 4294967295, %s158
          %s161 = sld [smem:[#allocation0]]
          %s162 = sadd.s32 2, %s161
          %s164 = sshll.u32 7, 26
          %s165 = sxor.u32 4294967295, %s164
          %s166 = sand.u32 0, %s165
          %s167 = sshll.u32 %s162, 26
          %s168 = sor.u32 %s166, %s167
          %s169 = sshll.u32 %s145, 4
          %s170 = int_to_ptr.vmem [resolvable:$true] %s169
          %176 = sst [smem:[#allocation7]] 2048
          %s177 = scalar_lea.smem [#allocation7], 1
          %178 = sst [smem:[%s177]] 512
          %s179 = scalar_lea.smem [#allocation7], 2
          %180 = sst [smem:[%s179]] 2
          %s181 = scalar_lea.smem [#allocation7], 3
          %182 = sst [smem:[%s181]] 256
          %s183 = scalar_lea.smem [#allocation7], 4
          %184 = sst [smem:[%s183]] 256
          %s185 = scalar_lea.smem [#allocation7], 5
          %186 = sst [smem:[%s185]] 16
          %188 = dma.general %s156, 1024, %s170, %s142, [#allocation6], [#allocation7], %s168, 0
        $region20: #{tpu_custom_call.1} parent=15 // pred_fallthru
          _
        // Predicated region
        $region21: #{tpu_custom_call.1} parent=15 // pred_check
          %p189 = pneg %p83
        $region22: #{tpu_custom_call.1} parent=15 // pred_check_branch
          %191 = sbr.rel (%p189) target = $region24
        $region23: #{tpu_custom_call.1} parent=15 // pred_region
          %p192 = scmp.lt.s32.totalorder %s21, 3
          %s193 = scalar_select %p192, %s21, 3
          %s194 = smul.addr %s193, 4
          %s195 = smul.addr %s194, 8
          %s196 = scalar_lea.vmem %s1, %s195
        $region24: #{tpu_custom_call.1} parent=15 // pred_fallthru
          _
      $region16: #{tpu_custom_call.1} parent=5 // pred_fallthru
        _
      %p197 = scmp.le.s32.totalorder 1, %s14
      %p198 = scmp.lt.s32.totalorder %s14, 5
      %p199 = pnand %p197, %p198
      %p200 = pneg %p199
      // Predicated region
      $region25: #{tpu_custom_call.1} parent=5 // pred_check
        _
      $region26: #{tpu_custom_call.1} parent=5 // pred_check_branch
        %202 = sbr.rel (%p199) target = $region28
      $region27: #{tpu_custom_call.1} parent=5 // pred_region
        %s203 = ssub.s32 %s14, 1
        %s204 = sand.u32 %s50, 1
        %s205 = scalar_lea.sflag [#allocation3], %s204
        %s206 = sand.u32 %s50, 1
        %s207 = smul.addr %s206, 64
        %s208 = scalar_lea.vmem [#allocation2], %s207
        // Predicated region
        $region29: #{tpu_custom_call.1} parent=27 // pred_check
          %p209 = pneg %p63
        $region30: #{tpu_custom_call.1} parent=27 // pred_check_branch
          %211 = sbr.rel (%p209) target = $region32
        $region31: #{tpu_custom_call.1} parent=27 // pred_region
          %212 = dma.done %s205, 1024
        $region32: #{tpu_custom_call.1} parent=27 // pred_fallthru
          _
        %s213 = sand.u32 %s50, 1
        %s214 = scalar_lea.sflag [#allocation3], %s213
        %s215 = sand.u32 %s50, 1
        %s216 = smul.addr %s215, 64
        %s217 = scalar_lea.vmem [#allocation2], %s216
        %p218 = pneg %p63
        %p219 = pneg %p60
        %p220 = scmp.lt.s32.totalorder %s24, 3
        %s221 = scalar_select %p220, %s24, 3
        %s222 = smul.addr %s221, 4
        %s223 = smul.addr %s222, 8
        %s224 = scalar_lea.vmem %s1, %s223
        %p225 = pneg %p89
        %p226 = pneg %p86
        %p227 = pneg %p119
        %p228 = pneg %p116
        %s229 = sand.u32 %s106, 1
        %s230 = scalar_lea.sflag [#allocation4], %s229
        %s231 = sand.u32 %s106, 1
        %s232 = smul.addr %s231, 128
        %s233 = scalar_lea.vmem [#allocation5], %s232
        %s234 = smul.u32 2, %s25
        %s235 = smul.u32 2, %s26
        %p236 = scmp.lt.s32.totalorder %s24, 3
        %s237 = scalar_select %p236, %s24, 3
        %s238 = smul.addr %s237, 4
        %s239 = smul.addr %s238, 8
        %s240 = scalar_lea.vmem %s1, %s239
        %s241 = smul.u32 2, %s25
        %s242 = smul.u32 2, %s26
        %v243 = vld [vmem:[%s240] sm:$0xff]
        %v244 = vld [vmem:[%s240 + $0x8] sm:$0xff]
        %v245 = vld [vmem:[%s240 + $0x10] sm:$0xff]
        %v246 = vld [vmem:[%s240 + $0x18] sm:$0xff]
        %v247 = vld [vmem:[%s208] sm:$0xff]
        %v248 = vld [vmem:[%s208 + $0x8] sm:$0xff]
        %v249 = vld [vmem:[%s208 + $0x10] sm:$0xff]
        %v250 = vld [vmem:[%s208 + $0x18] sm:$0xff]
        %vm251 = vcmask 130048
        %v253 = vsel %vm251, %v243, 0
        %v256 = vsel %vm251, %v244, 0
        %v259 = vsel %vm251, %v245, 0
        %v262 = vsel %vm251, %v246, 0
        %264 = vmatprep.subr.mxu0 %v248
        %265 = vmatpush1.msra.mxu0 %v247
        %266 = vmatprep.subr.mxu0 %v250
        %267 = vmatpush1.msra.mxu0 %v249
        %268 = vmatprep.subr.mxu0 0.0
        %269 = vmatpush1.msra.mxu0 0.0
        %270 = vmatprep.subr.mxu0 0.0
        %271 = vmatpush1.msra.mxu0 0.0
        %272 = vmatprep.subr.mxu0 0.0
        %273 = vmatpush1.msra.mxu0 0.0
        %274 = vmatprep.subr.mxu0 0.0
        %275 = vmatpush1.msra.mxu0 0.0
        %276 = vmatprep.subr.mxu0 0.0
        %277 = vmatpush1.msra.mxu0 0.0
        %278 = vmatprep.subr.mxu0 0.0
        %279 = vmatpush1.msra.mxu0 0.0
        %280 = vmatprep.subr.mxu0 0.0
        %281 = vmatpush1.msra.mxu0 0.0
        %282 = vmatprep.subr.mxu0 0.0
        %283 = vmatpush1.msra.mxu0 0.0
        %284 = vmatprep.subr.mxu0 0.0
        %285 = vmatpush1.msra.mxu0 0.0
        %286 = vmatprep.subr.mxu0 0.0
        %287 = vmatpush1.msra.mxu0 0.0
        %288 = vmatprep.subr.mxu0 0.0
        %289 = vmatpush1.msra.mxu0 0.0
        %290 = vmatprep.subr.mxu0 0.0
        %291 = vmatpush1.msra.mxu0 0.0
        %292 = vmatprep.subr.mxu0 0.0
        %293 = vmatpush1.msra.mxu0 0.0
        %294 = vmatprep.subr.mxu0 0.0
        %295 = vmatpush1.msra.mxu0 0.0
        %296 = vmatprep.subr.mxu0 0.0
        %297 = vmatpush1.msra.mxu0 0.0
        %298 = vmatprep.subr.mxu0 0.0
        %299 = vmatpush1.msra.mxu0 0.0
        %300 = vmatprep.subr.mxu0 0.0
        %301 = vmatpush1.msra.mxu0 0.0
        %302 = vmatprep.subr.mxu0 0.0
        %303 = vmatpush1.msra.mxu0 0.0
        %304 = vmatprep.subr.mxu0 0.0
        %305 = vmatpush1.msra.mxu0 0.0
        %306 = vmatprep.subr.mxu0 0.0
        %307 = vmatpush1.msra.mxu0 0.0
        %308 = vmatprep.subr.mxu0 0.0
        %309 = vmatpush1.msra.mxu0 0.0
        %310 = vmatprep.subr.mxu0 0.0
        %311 = vmatpush1.msra.mxu0 0.0
        %312 = vmatprep.subr.mxu0 0.0
        %313 = vmatpush1.msra.mxu0 0.0
        %314 = vmatprep.subr.mxu0 0.0
        %315 = vmatpush1.msra.mxu0 0.0
        %316 = vmatprep.subr.mxu0 0.0
        %317 = vmatpush1.msra.mxu0 0.0
        %318 = vmatprep.subr.mxu0 0.0
        %319 = vmatpush1.msra.mxu0 0.0
        %320 = vmatprep.subr.mxu0 0.0
        %321 = vmatpush1.msra.mxu0 0.0
        %322 = vmatprep.subr.mxu0 0.0
        %323 = vmatpush1.msra.mxu0 0.0
        %324 = vmatprep.subr.mxu0 0.0
        %325 = vmatpush1.msra.mxu0 0.0
        %326 = vmatprep.subr.mxu0 0.0
        %327 = vmatpush1.msra.mxu0 0.0
        %328 = vmatprep.mubr.f32.mxu0 0.0
        %329 = vmatmul.mubr.f32.gmra.mrb[0].mxu0 %v253
        %v330 = vpop.f32.mrb[0].mxu0
        %v331 = vadd.f32 0.0, %v330
        %v332 = vpop.f32.mrb[0].mxu0
        %v333 = vadd.f32 0.0, %v332
        %334 = vmatprep.mubr.f32.mxu0 0.0
        %335 = vmatmul.mubr.f32.gmra.mrb[0].mxu0 %v256
        %v336 = vpop.f32.mrb[0].mxu0
        %v337 = vadd.f32 0.0, %v336
        %v338 = vpop.f32.mrb[0].mxu0
        %v339 = vadd.f32 0.0, %v338
        %340 = vmatprep.mubr.f32.mxu0 0.0
        %341 = vmatmul.mubr.f32.gmra.mrb[0].mxu0 %v259
        %v342 = vpop.f32.mrb[0].mxu0
        %v343 = vadd.f32 0.0, %v342
        %v344 = vpop.f32.mrb[0].mxu0
        %v345 = vadd.f32 0.0, %v344
        %346 = vmatprep.mubr.f32.mxu0 0.0
        %347 = vmatmul.mubr.f32.gmra.mrb[0].mxu0 %v262
        %v348 = vpop.f32.mrb[0].mxu0
        %v349 = vadd.f32 0.0, %v348
        %v350 = vpop.f32.mrb[0].mxu0
        %v351 = vadd.f32 0.0, %v350
        %352 = vdwg.mxu0
        %353 = vst [vmem:[%s233] sm:$0xff] %v331
        %354 = vst [vmem:[%s233 + $0x8] sm:$0xff] %v333
        %355 = vst [vmem:[%s233 + $0x10] sm:$0xff] %v337
        %356 = vst [vmem:[%s233 + $0x18] sm:$0xff] %v339
        %357 = vst [vmem:[%s233 + $0x20] sm:$0xff] %v343
        %358 = vst [vmem:[%s233 + $0x28] sm:$0xff] %v345
        %359 = vst [vmem:[%s233 + $0x30] sm:$0xff] %v349
        %360 = vst [vmem:[%s233 + $0x38] sm:$0xff] %v351
        %s361 = scalar_lea.vmem %s208, 32 [#allocation2]
        %v362 = vld [vmem:[%s361] sm:$0xff]
        %v363 = vld [vmem:[%s361 + $0x8] sm:$0xff]
        %v364 = vld [vmem:[%s361 + $0x10] sm:$0xff]
        %v365 = vld [vmem:[%s361 + $0x18] sm:$0xff]
        %366 = vmatprep.subr.mxu0 %v363
        %367 = vmatpush1.msra.mxu0 %v362
        %368 = vmatprep.subr.mxu0 %v365
        %369 = vmatpush1.msra.mxu0 %v364
        %370 = vmatprep.subr.mxu0 0.0
        %371 = vmatpush1.msra.mxu0 0.0
        %372 = vmatprep.subr.mxu0 0.0
        %373 = vmatpush1.msra.mxu0 0.0
        %374 = vmatprep.subr.mxu0 0.0
        %375 = vmatpush1.msra.mxu0 0.0
        %376 = vmatprep.subr.mxu0 0.0
        %377 = vmatpush1.msra.mxu0 0.0
        %378 = vmatprep.subr.mxu0 0.0
        %379 = vmatpush1.msra.mxu0 0.0
        %380 = vmatprep.subr.mxu0 0.0
        %381 = vmatpush1.msra.mxu0 0.0
        %382 = vmatprep.subr.mxu0 0.0
        %383 = vmatpush1.msra.mxu0 0.0
        %384 = vmatprep.subr.mxu0 0.0
        %385 = vmatpush1.msra.mxu0 0.0
        %386 = vmatprep.subr.mxu0 0.0
        %387 = vmatpush1.msra.mxu0 0.0
        %388 = vmatprep.subr.mxu0 0.0
        %389 = vmatpush1.msra.mxu0 0.0
        %390 = vmatprep.subr.mxu0 0.0
        %391 = vmatpush1.msra.mxu0 0.0
        %392 = vmatprep.subr.mxu0 0.0
        %393 = vmatpush1.msra.mxu0 0.0
        %394 = vmatprep.subr.mxu0 0.0
        %395 = vmatpush1.msra.mxu0 0.0
        %396 = vmatprep.subr.mxu0 0.0
        %397 = vmatpush1.msra.mxu0 0.0
        %398 = vmatprep.subr.mxu0 0.0
        %399 = vmatpush1.msra.mxu0 0.0
        %400 = vmatprep.subr.mxu0 0.0
        %401 = vmatpush1.msra.mxu0 0.0
        %402 = vmatprep.subr.mxu0 0.0
        %403 = vmatpush1.msra.mxu0 0.0
        %404 = vmatprep.subr.mxu0 0.0
        %405 = vmatpush1.msra.mxu0 0.0
        %406 = vmatprep.subr.mxu0 0.0
        %407 = vmatpush1.msra.mxu0 0.0
        %408 = vmatprep.subr.mxu0 0.0
        %409 = vmatpush1.msra.mxu0 0.0
        %410 = vmatprep.subr.mxu0 0.0
        %411 = vmatpush1.msra.mxu0 0.0
        %412 = vmatprep.subr.mxu0 0.0
        %413 = vmatpush1.msra.mxu0 0.0
        %414 = vmatprep.subr.mxu0 0.0
        %415 = vmatpush1.msra.mxu0 0.0
        %416 = vmatprep.subr.mxu0 0.0
        %417 = vmatpush1.msra.mxu0 0.0
        %418 = vmatprep.subr.mxu0 0.0
        %419 = vmatpush1.msra.mxu0 0.0
        %420 = vmatprep.subr.mxu0 0.0
        %421 = vmatpush1.msra.mxu0 0.0
        %422 = vmatprep.subr.mxu0 0.0
        %423 = vmatpush1.msra.mxu0 0.0
        %424 = vmatprep.subr.mxu0 0.0
        %425 = vmatpush1.msra.mxu0 0.0
        %426 = vmatprep.subr.mxu0 0.0
        %427 = vmatpush1.msra.mxu0 0.0
        %428 = vmatprep.subr.mxu0 0.0
        %429 = vmatpush1.msra.mxu0 0.0
        %430 = vmatprep.mubr.f32.mxu0 0.0
        %431 = vmatmul.mubr.f32.gmra.mrb[0].mxu0 %v253
        %v432 = vpop.f32.mrb[0].mxu0
        %v433 = vadd.f32 0.0, %v432
        %v434 = vpop.f32.mrb[0].mxu0
        %v435 = vadd.f32 0.0, %v434
        %436 = vmatprep.mubr.f32.mxu0 0.0
        %437 = vmatmul.mubr.f32.gmra.mrb[0].mxu0 %v256
        %v438 = vpop.f32.mrb[0].mxu0
        %v439 = vadd.f32 0.0, %v438
        %v440 = vpop.f32.mrb[0].mxu0
        %v441 = vadd.f32 0.0, %v440
        %442 = vmatprep.mubr.f32.mxu0 0.0
        %443 = vmatmul.mubr.f32.gmra.mrb[0].mxu0 %v259
        %v444 = vpop.f32.mrb[0].mxu0
        %v445 = vadd.f32 0.0, %v444
        %v446 = vpop.f32.mrb[0].mxu0
        %v447 = vadd.f32 0.0, %v446
        %448 = vmatprep.mubr.f32.mxu0 0.0
        %449 = vmatmul.mubr.f32.gmra.mrb[0].mxu0 %v262
        %v450 = vpop.f32.mrb[0].mxu0
        %v451 = vadd.f32 0.0, %v450
        %v452 = vpop.f32.mrb[0].mxu0
        %v453 = vadd.f32 0.0, %v452
        %454 = vdwg.mxu0
        %s455 = scalar_lea.vmem %s233, 64 [#allocation5]
        %456 = vst [vmem:[%s455] sm:$0xff] %v433
        %457 = vst [vmem:[%s455 + $0x8] sm:$0xff] %v435
        %458 = vst [vmem:[%s455 + $0x10] sm:$0xff] %v439
        %459 = vst [vmem:[%s455 + $0x18] sm:$0xff] %v441
        %460 = vst [vmem:[%s455 + $0x20] sm:$0xff] %v445
        %461 = vst [vmem:[%s455 + $0x28] sm:$0xff] %v447
        %462 = vst [vmem:[%s455 + $0x30] sm:$0xff] %v451
        %463 = vst [vmem:[%s455 + $0x38] sm:$0xff] %v453
        %s464 = sand.u32 %s106, 1
        %s465 = scalar_lea.sflag [#allocation4], %s464
        %s466 = sand.u32 %s106, 1
        %s467 = smul.addr %s466, 128
        %s468 = scalar_lea.vmem [#allocation5], %s467
        // Predicated region
        $region33: #{tpu_custom_call.1} parent=27 // pred_check
          %p469 = pneg %p116
        $region34: #{tpu_custom_call.1} parent=27 // pred_check_branch
          %471 = sbr.rel (%p469) target = $region36
        $region35: #{tpu_custom_call.1} parent=27 // pred_region
          #allocation9 [shape = 'u32[6]{0}', space=smem, size = 0x18, scoped, tag = 'DMA stride descriptor']
          %s472 = smul.u32 2, %s25
          %s473 = smul.u32 2, %s26
          %s475 = ssub.s32 2048, 2048
          %476 = vsyncadd %s465, %s475
          %s477 = smul.addr %s24, 8
          %s478 = sadd.s32 %s473, %s477
          %s479 = smul.addr %s472, 32
          %s480 = sadd.s32 %s478, %s479
          %s481 = smul.addr %s480, 128
          %s482 = scalar_lea.hbm %s2, %s481
          %s484 = sshll.u32 1, 14
          %s485 = sxor.u32 4294967295, %s484
          %s488 = sshll.u32 7, 18
          %s489 = sxor.u32 4294967295, %s488
          %s490 = sand.u32 0, %s489
          %s492 = sor.u32 %s490, 0
          %s494 = sshll.u32 3, 24
          %s495 = sxor.u32 4294967295, %s494
          %s496 = sand.u32 %s492, %s495
          %s498 = sor.u32 %s496, 0
          %s499 = sshll.u32 %s468, 4
          %s500 = int_to_ptr.vmem [resolvable:$true] %s499
          %506 = sst [smem:[#allocation9]] 1024
          %s507 = scalar_lea.smem [#allocation9], 1
          %508 = sst [smem:[%s507]] 4096
          %s509 = scalar_lea.smem [#allocation9], 2
          %510 = sst [smem:[%s509]] 4
          %s511 = scalar_lea.smem [#allocation9], 3
          %512 = sst [smem:[%s511]] 256
          %s513 = scalar_lea.smem [#allocation9], 4
          %514 = sst [smem:[%s513]] 256
          %s515 = scalar_lea.smem [#allocation9], 5
          %516 = sst [smem:[%s515]] 16
          %518 = dma.general %s500, 2048, %s482, %s465, [#allocation8], [#allocation9], %s498, 0
        $region36: #{tpu_custom_call.1} parent=27 // pred_fallthru
          _
      $region28: #{tpu_custom_call.1} parent=5 // pred_fallthru
        _
      %p519 = scmp.le.s32.totalorder 2, %s14
      // Predicated region
      $region37: #{tpu_custom_call.1} parent=5 // pred_check
        %p520 = pneg %p519
      $region38: #{tpu_custom_call.1} parent=5 // pred_check_branch
        %522 = sbr.rel (%p520) target = $region40
      $region39: #{tpu_custom_call.1} parent=5 // pred_region
        %s523 = ssub.s32 %s14, 2
        // Predicated region
        $region41: #{tpu_custom_call.1} parent=39 // pred_check
          %p524 = pneg %p122
        $region42: #{tpu_custom_call.1} parent=39 // pred_check_branch
          %526 = sbr.rel (%p524) target = $region44
        $region43: #{tpu_custom_call.1} parent=39 // pred_region
          %s527 = sand.u32 %s107, 1
          %s528 = scalar_lea.sflag [#allocation4], %s527
          %s529 = sand.u32 %s107, 1
          %s530 = smul.addr %s529, 128
          %s531 = scalar_lea.vmem [#allocation5], %s530
          %532 = dma.done %s528, 2048
        $region44: #{tpu_custom_call.1} parent=39 // pred_fallthru
          _
      $region40: #{tpu_custom_call.1} parent=5 // pred_fallthru
        _
    $region6: #{tpu_custom_call.1} parent=1 // loop_footer
      %s18 = sadd.s32 1, %s14
    $region7: #{tpu_custom_call.1} parent=1 // loop_footer_branch
      %13 = sbr.rel target = $region3
    $region8: #{tpu_custom_call.1} parent=1 // loop_exit
      _
    %533 = vsyncpa [#allocation3], 1
    %s534 = scalar_lea.sflag [#allocation3], 1
    %535 = vsyncpa %s534, 1
    %536 = vsyncpa [#allocation4], 1
    %s537 = scalar_lea.sflag [#allocation4], 1
    %538 = vsyncpa %s537, 1

</llo_original>
